<compile_context>
chip_gen: v6e
topology: v6e:2x2x1
jax: 0.10.0
libtpu: 0.0.40
codegen_flags: <defaults>
</compile_context>

<pallas_src>
import jax
import jax.numpy as jnp
from jax.experimental import pallas as pl
from jax.experimental.pallas import tpu as pltpu

_EPS = 1e-12  # F.normalize default


def _round_up(v, m):
    return (v + m - 1) // m * m


# ---------------------------------------------------------------------------
# Kernel 0: xw1 = x @ W1   (row-tiled; weight resident)
# ---------------------------------------------------------------------------
def _xw_kernel(x_ref, w_ref, out_ref):
    out_ref[...] = jnp.dot(
        x_ref[...], w_ref[...], preferred_element_type=jnp.float32
    ).astype(out_ref.dtype)


# ---------------------------------------------------------------------------
# Kernel 1: SAGE layer 1 (aggregate + relu + l2norm) fused with the layer-2
# projection:  self2 = l2norm(relu(concat(xw1, adj@xw1))) @ W2
# Grid = (row tiles i, adj contraction tiles k); accumulator in VMEM scratch.
# ---------------------------------------------------------------------------
def _sage1_proj_kernel(adj_ref, xw_k_ref, xw_self_ref, w2a_ref, w2b_ref,
                       self2_ref, acc_ref):
    k = pl.program_id(1)

    @pl.when(k == 0)
    def _():
        acc_ref[...] = jnp.zeros_like(acc_ref)

    acc_ref[...] += jnp.dot(
        adj_ref[...], xw_k_ref[...], preferred_element_type=jnp.float32
    )

    @pl.when(k == pl.num_programs(1) - 1)
    def _():
        a = jnp.maximum(xw_self_ref[...].astype(jnp.float32), 0.0)   # self branch
        b = jnp.maximum(acc_ref[...], 0.0)                           # neighbor branch
        sumsq = (jnp.sum(a * a, axis=1, keepdims=True)
                 + jnp.sum(b * b, axis=1, keepdims=True))
        inv = jax.lax.rsqrt(jnp.maximum(sumsq, _EPS * _EPS))
        a = (a * inv).astype(w2a_ref.dtype)
        b = (b * inv).astype(w2b_ref.dtype)
        s2 = (jnp.dot(a, w2a_ref[...], preferred_element_type=jnp.float32)
              + jnp.dot(b, w2b_ref[...], preferred_element_type=jnp.float32))
        self2_ref[...] = s2.astype(self2_ref.dtype)


# ---------------------------------------------------------------------------
# Kernel 2: SAGE layer 2 aggregate (adj @ self2) + relu + l2norm + final fc.
# ---------------------------------------------------------------------------
def _sage2_fc_kernel(adj_ref, s2_k_ref, s2_self_ref, wfa_ref, wfb_ref, bias_ref,
                     out_ref, acc_ref):
    k = pl.program_id(1)

    @pl.when(k == 0)
    def _():
        acc_ref[...] = jnp.zeros_like(acc_ref)

    acc_ref[...] += jnp.dot(
        adj_ref[...], s2_k_ref[...], preferred_element_type=jnp.float32
    )

    @pl.when(k == pl.num_programs(1) - 1)
    def _():
        a = jnp.maximum(s2_self_ref[...].astype(jnp.float32), 0.0)   # self branch
        b = jnp.maximum(acc_ref[...], 0.0)                           # neighbor branch
        sumsq = (jnp.sum(a * a, axis=1, keepdims=True)
                 + jnp.sum(b * b, axis=1, keepdims=True))
        inv = jax.lax.rsqrt(jnp.maximum(sumsq, _EPS * _EPS))
        a = (a * inv).astype(wfa_ref.dtype)
        b = (b * inv).astype(wfb_ref.dtype)
        out = (jnp.dot(a, wfa_ref[...], preferred_element_type=jnp.float32)
               + jnp.dot(b, wfb_ref[...], preferred_element_type=jnp.float32)
               + bias_ref[...])
        out_ref[...] = out.astype(out_ref.dtype)


# ---------------------------------------------------------------------------
# Wrapper
# ---------------------------------------------------------------------------
def graphsage_forward(x, adj, w1, w2, wfc, bfc, *, tile=128,
                      compute_dtype=jnp.float32):
    """x: (N, nfeat), adj: (N, N) dense, w1: (nfeat, nhid1),
    w2: (2*nhid1, nhid2), wfc: (nclass, 2*nhid2) [PyTorch layout], bfc: (nclass,).
    compute_dtype: matmul operand dtype (bf16 recommended on v5e/v6e/v7x)."""
    N, nfeat = x.shape
    nhid1 = w1.shape[1]
    nhid2 = w2.shape[1]
    nclass = wfc.shape[0]

    # ---- tile / padding bookkeeping ----
    tile = min(tile, _round_up(N, 8))          # small-N fallback (full-dim blocks)
    n_pad = _round_up(N, tile)
    c_pad = max(128, _round_up(nclass, 128))   # lane-dense fc output slab

    xp = x
    adjp = adj
    if n_pad != N:
        xp = jnp.zeros((n_pad, nfeat), x.dtype).at[:N].set(x)
        adjp = jnp.zeros((n_pad, n_pad), adj.dtype).at[:N, :N].set(adj)
    xp = xp.astype(compute_dtype)
    adjp = adjp.astype(compute_dtype)

    # weights: split concat halves, transpose fc to (feat, class), pad classes
    w1c = w1.astype(compute_dtype)
    w2a = w2[:nhid1].astype(compute_dtype)
    w2b = w2[nhid1:].astype(compute_dtype)
    wfc_t = wfc.T.astype(jnp.float32)                      # (2*nhid2, nclass)
    wfa = jnp.zeros((nhid2, c_pad), jnp.float32).at[:, :nclass].set(wfc_t[:nhid2])
    wfb = jnp.zeros((nhid2, c_pad), jnp.float32).at[:, :nclass].set(wfc_t[nhid2:])
    wfa = wfa.astype(compute_dtype)
    wfb = wfb.astype(compute_dtype)
    bias = jnp.zeros((1, c_pad), jnp.float32).at[0, :nclass].set(
        bfc.astype(jnp.float32))

    n_row = n_pad // tile
    n_k = n_pad // tile
    const = lambda i, k: (0, 0)

    # ---- kernel 0: xw1 = x @ W1 ----
    xw1 = pl.pallas_call(
        _xw_kernel,
        out_shape=jax.ShapeDtypeStruct((n_pad, nhid1), compute_dtype),
        grid_spec=pltpu.PrefetchScalarGridSpec(
            num_scalar_prefetch=0,
            grid=(n_row,),
            in_specs=[pl.BlockSpec((tile, nfeat), lambda i: (i, 0)),
                      pl.BlockSpec((nfeat, nhid1), lambda i: (0, 0))],
            out_specs=pl.BlockSpec((tile, nhid1), lambda i: (i, 0)),
        ),
        compiler_params=pltpu.CompilerParams(dimension_semantics=("parallel",)),
    )(xp, w1c)

    # ---- kernel 1: layer-1 aggregate/norm + layer-2 projection ----
    self2 = pl.pallas_call(
        _sage1_proj_kernel,
        out_shape=jax.ShapeDtypeStruct((n_pad, nhid2), compute_dtype),
        grid_spec=pltpu.PrefetchScalarGridSpec(
            num_scalar_prefetch=0,
            grid=(n_row, n_k),
            in_specs=[pl.BlockSpec((tile, tile), lambda i, k: (i, k)),     # adj
                      pl.BlockSpec((tile, nhid1), lambda i, k: (k, 0)),    # xw1 (K)
                      pl.BlockSpec((tile, nhid1), lambda i, k: (i, 0)),    # xw1 (self)
                      pl.BlockSpec((nhid1, nhid2), const),                 # W2a
                      pl.BlockSpec((nhid1, nhid2), const)],                # W2b
            out_specs=pl.BlockSpec((tile, nhid2), lambda i, k: (i, 0)),
            scratch_shapes=[pltpu.VMEM((tile, nhid1), jnp.float32)],
        ),
        compiler_params=pltpu.CompilerParams(
            dimension_semantics=("parallel", "arbitrary")),
    )(adjp, xw1, xw1, w2a, w2b)

    # ---- kernel 2: layer-2 aggregate/norm + fc ----
    out_pad = pl.pallas_call(
        _sage2_fc_kernel,
        out_shape=jax.ShapeDtypeStruct((n_pad, c_pad), jnp.float32),
        grid_spec=pltpu.PrefetchScalarGridSpec(
            num_scalar_prefetch=0,
            grid=(n_row, n_k),
            in_specs=[pl.BlockSpec((tile, tile), lambda i, k: (i, k)),     # adj
                      pl.BlockSpec((tile, nhid2), lambda i, k: (k, 0)),    # self2 (K)
                      pl.BlockSpec((tile, nhid2), lambda i, k: (i, 0)),    # self2 (self)
                      pl.BlockSpec((nhid2, c_pad), const),                 # Wfc (a half)
                      pl.BlockSpec((nhid2, c_pad), const),                 # Wfc (b half)
                      pl.BlockSpec((1, c_pad), const)],                    # bias
            out_specs=pl.BlockSpec((tile, c_pad), lambda i, k: (i, 0)),
            scratch_shapes=[pltpu.VMEM((tile, nhid2), jnp.float32)],
        ),
        compiler_params=pltpu.CompilerParams(
            dimension_semantics=("parallel", "arbitrary")),
    )(adjp, self2, self2, wfa, wfb, bias)

    return out_pad[:N, :nclass]


# ---------------------------------------------------------------------------
# Pure-JAX reference (mirrors the PyTorch module in eval mode)
# ---------------------------------------------------------------------------
def graphsage_ref(x, adj, w1, w2, wfc, bfc):
    def sage(h, w):
        neigh = adj @ h
        return jnp.concatenate([h @ w, neigh @ w], axis=1)

    h = jax.nn.relu(sage(x, w1))
    h = h / jnp.maximum(jnp.linalg.norm(h, axis=1, keepdims=True), _EPS)
    h = jax.nn.relu(sage(h, w2))
    h = h / jnp.maximum(jnp.linalg.norm(h, axis=1, keepdims=True), _EPS)
    return h @ wfc.T + bfc


if __name__ == "__main__":
    # Small but tile-exercising sizes (grid = 2x2 row/contraction tiles).
    N, nfeat, nhid1, nhid2, nclass = 256, 192, 128, 128, 8

    key = jax.random.PRNGKey(0)
    kx, ka, k1, k2, k3, k4 = jax.random.split(key, 6)

    x = jax.random.normal(kx, (N, nfeat), dtype=jnp.float32)

    # deterministic dense adjacency: random graph + self loops, row-normalized
    a = (jax.random.uniform(ka, (N, N)) > 0.9).astype(jnp.float32)
    a = jnp.maximum(a, a.T) + jnp.eye(N, dtype=jnp.float32)
    adj = a / jnp.sum(a, axis=1, keepdims=True)

    def glorot(k, shape):
        lim = jnp.sqrt(6.0 / (shape[0] + shape[1]))
        return jax.random.uniform(k, shape, jnp.float32, -lim, lim)

    w1 = glorot(k1, (nfeat, nhid1))
    w2 = glorot(k2, (2 * nhid1, nhid2))
    wfc = glorot(k3, (nclass, 2 * nhid2))      # PyTorch nn.Linear weight layout
    bfc = 0.01 * jax.random.normal(k4, (nclass,), dtype=jnp.float32)

    ref = graphsage_ref(x, adj, w1, w2, wfc, bfc)

    # f32 MXU path: matches reference tightly (only matmul reassociation).
    out = graphsage_forward(x, adj, w1, w2, wfc, bfc, compute_dtype=jnp.float32)
    out = jax.block_until_ready(out)
    assert out.shape == (N, nclass)
    assert jnp.allclose(out, ref, atol=2e-4, rtol=2e-4), "f32 mismatch vs reference"

    # bf16 MXU path (v5e/v6e/v7x fast path): f32 accumulation + f32 epilogue.
    out_bf16 = graphsage_forward(x, adj, w1, w2, wfc, bfc,
                                 compute_dtype=jnp.bfloat16)
    out_bf16 = jax.block_until_ready(out_bf16)
    assert jnp.allclose(out_bf16, ref, atol=1e-1, rtol=1e-1), "bf16 mismatch vs reference"

    print("KERNEL_OK")
</pallas_src>

<mosaic_0001>
module attributes {stable_mosaic.version = 11 : i64} {
  func.func @_xw_kernel(%arg0: i32, %arg1: memref<128x192xf32, #tpu.memory_space<vmem>>, %arg2: memref<192x128xf32, #tpu.memory_space<vmem>>, %arg3: memref<128x128xf32, #tpu.memory_space<vmem>>) attributes {dimension_semantics = [#tpu.dimension_semantics<parallel>], iteration_bounds = array<i64: 2>, scalar_prefetch = 0 : i64, scratch_operands = 0 : i64, tpu.core_type = #tpu.core_type<tc>, window_params = [{transform_indices = @transform_0, window_bounds = array<i64: 128, 192>}, {pipeline_mode = #tpu.pipeline_mode<synchronous>, transform_indices = @transform_1, window_bounds = array<i64: 192, 128>}, {transform_indices = @transform_2, window_bounds = array<i64: 128, 128>}]} {
    %c0 = arith.constant 0 : index
    %c0_0 = arith.constant 0 : index
    %0 = vector.load %arg1[%c0, %c0_0] : memref<128x192xf32, #tpu.memory_space<vmem>>, vector<128x192xf32>
    %c0_1 = arith.constant 0 : index
    %c0_2 = arith.constant 0 : index
    %1 = vector.load %arg2[%c0_1, %c0_2] : memref<192x128xf32, #tpu.memory_space<vmem>>, vector<192x128xf32>
    %cst = arith.constant dense<0.000000e+00> : vector<128x128xf32>
    %2 = tpu.matmul %0, %1, %cst {dimension_numbers = #tpu.dot_dimension_numbers<[1], [0], [0], [1], [0, 0, 1, 1], [], []>} : vector<128x192xf32>, vector<192x128xf32>, vector<128x128xf32> -> vector<128x128xf32>
    %c0_3 = arith.constant 0 : index
    %c0_4 = arith.constant 0 : index
    %3 = vector.load %arg3[%c0_3, %c0_4] : memref<128x128xf32, #tpu.memory_space<vmem>>, vector<128x128xf32>
    tpu.vector_store %arg3[%c0_3, %c0_4], %2 {strides = array<i32>} : memref<128x128xf32, #tpu.memory_space<vmem>>, vector<128x128xf32>,
    return
  }
  func.func @transform_0(%arg0: i32) -> (i32, i32) {
    %c0_i32 = arith.constant 0 : i32
    %c0_i32_0 = arith.constant 0 : i32
    return %arg0, %c0_i32 : i32, i32
  }
  func.func @transform_1(%arg0: i32) -> (i32, i32) {
    %c0_i32 = arith.constant 0 : i32
    %c0_i32_0 = arith.constant 0 : i32
    %c0_i32_1 = arith.constant 0 : i32
    return %c0_i32, %c0_i32_0 : i32, i32
  }
  func.func @transform_2(%arg0: i32) -> (i32, i32) {
    %c0_i32 = arith.constant 0 : i32
    %c0_i32_0 = arith.constant 0 : i32
    return %arg0, %c0_i32 : i32, i32
  }
}

</mosaic_0001>

<llo_original>
// kernel: tpu_custom_call.1
$region0: #{tpu_custom_call.1}
  #allocation0 [shape = 'u32[]', space=smem, size = 0x4, offset = 0x4, fixed_abs, tag = 'smem constant byte address 0x4 - core index']
  #allocation1 [shape = 'u32[144,128]{1,0:T(1,128)}', space=vmem, size = 0x12000, scoped, tag = 'internal scratch']
  %s0 = inlined_call_operand.vmem [shape: f32[256,192], index: 0, kind: input, shape index: {}]
  %s1 = inlined_call_operand.vmem [shape: f32[192,128], index: 1, kind: input, shape index: {}]
  %s2 = inlined_call_operand.hbm [shape: f32[256,128], index: 2, kind: output, shape index: {}]
  %s3 = sld [smem:[#allocation0]]
  $region41: #{tpu_custom_call.1} parent=0
    _
  %s5 = ssub.s32 1, %s3
  %s6 = scalar_select 0, %s5, %s3
  $region1: #{tpu_custom_call.1} parent=0
    #allocation2 [shape = 'u8[131072]{0}', space=vmem, size = 0x20000, scoped, tag = 'output window, operand 0']
    #allocation3 [shape = 's32[2]{0}', space=sflag, size = 0x8, scoped, tag = 'scoped memory for tpu_custom_call.1']
    %7 = vsyncpa [#allocation3], 0
    %s8 = scalar_lea.sflag [#allocation3], 1
    %9 = vsyncpa %s8, 0
    loop: start=0, step=1, limit=4
    $region2: #{tpu_custom_call.1} parent=1 // loop_pre_header
      _
    $region3: #{tpu_custom_call.1} parent=1 // loop_header
      %s11 = sphi 0, %s15
      %p12 = scmp.ge.s32.totalorder %s11, 4
      %s21 = sphi 0, %s23
      %s24 = sphi 0, %s21
      %s25 = sphi 0, %s24
      %s41 = sphi 0, %s25
      %s45 = sphi 0, %s45
      %s47 = sphi 0, %s45
      %s48 = sphi 0, %s47
      %s62 = sphi 0, %s48
      %s68 = sphi 0, %s70
      %s71 = sphi 0, %s68
      %s72 = sphi 0, %s71
      %s88 = sphi 0, %s72
    $region4: #{tpu_custom_call.1} parent=1 // loop_header_branch
      %14 = sbr.rel (%p12) target = $region8
    $region5: #{tpu_custom_call.1} parent=1 // loop_body
      %s16 = ssub.s32 %s11, 1
      %s17 = ssub.s32 %s11, 2
      %s18 = sadd.s32 %s11, 1
      %s19 = ssub.s32 %s11, %s18
      %p20 = scmp.eq.s32.totalorder %s19, 0
      %s22 = sadd.s32 %s21, 1
      %s23 = scalar_select %p20, %s21, %s22
      %p26 = pneg %p20
      %p27 = scmp.eq.s32.totalorder %s11, 1
      %p28 = por %p26, %p27
      %p29 = scmp.ne.s32.totalorder %s21, %s24
      %p30 = scmp.eq.s32.totalorder %s11, 0
      %p31 = por %p29, %p30
      %p32 = scmp.ne.s32.totalorder %s21, %s24
      %p33 = scmp.eq.s32.totalorder %s16, 1
      %p34 = por %p32, %p33
      %p35 = scmp.ne.s32.totalorder %s24, %s25
      %p36 = scmp.eq.s32.totalorder %s16, 0
      %p37 = por %p35, %p36
      %p38 = scmp.ne.s32.totalorder %s24, %s25
      %p39 = scmp.eq.s32.totalorder %s17, 1
      %p40 = por %p38, %p39
      %p42 = scmp.ne.s32.totalorder %s25, %s41
      %p43 = scmp.eq.s32.totalorder %s17, 0
      %p44 = por %p42, %p43
      %s46 = sadd.s32 %s45, 1
      %p49 = scmp.eq.s32.totalorder %s11, 1
      %p50 = scmp.ne.s32.totalorder %s45, %s47
      %p51 = scmp.eq.s32.totalorder %s11, 0
      %p52 = por %p50, %p51
      %p53 = scmp.ne.s32.totalorder %s45, %s47
      %p54 = scmp.eq.s32.totalorder %s16, 1
      %p55 = por %p53, %p54
      %p56 = scmp.ne.s32.totalorder %s47, %s48
      %p57 = scmp.eq.s32.totalorder %s16, 0
      %p58 = por %p56, %p57
      %p59 = scmp.ne.s32.totalorder %s47, %s48
      %p60 = scmp.eq.s32.totalorder %s17, 1
      %p61 = por %p59, %p60
      %p63 = scmp.ne.s32.totalorder %s48, %s62
      %p64 = scmp.eq.s32.totalorder %s17, 0
      %p65 = por %p63, %p64
      %s66 = ssub.s32 %s11, %s18
      %p67 = scmp.eq.s32.totalorder %s66, 0
      %s69 = sadd.s32 %s68, 1
      %s70 = scalar_select %p67, %s68, %s69
      %p73 = pneg %p67
      %p74 = scmp.eq.s32.totalorder %s11, 1
      %p75 = por %p73, %p74
      %p76 = scmp.ne.s32.totalorder %s68, %s71
      %p77 = scmp.eq.s32.totalorder %s11, 0
      %p78 = por %p76, %p77
      %p79 = scmp.ne.s32.totalorder %s68, %s71
      %p80 = scmp.eq.s32.totalorder %s16, 1
      %p81 = por %p79, %p80
      %p82 = scmp.ne.s32.totalorder %s71, %s72
      %p83 = scmp.eq.s32.totalorder %s16, 0
      %p84 = por %p82, %p83
      %p85 = scmp.ne.s32.totalorder %s71, %s72
      %p86 = scmp.eq.s32.totalorder %s17, 1
      %p87 = por %p85, %p86
      %p89 = scmp.ne.s32.totalorder %s72, %s88
      %p90 = scmp.eq.s32.totalorder %s17, 0
      %p91 = por %p89, %p90
      %p92 = scmp.le.s32.totalorder 1, %s11
      %p93 = scmp.lt.s32.totalorder %s11, 3
      %p94 = pnand %p92, %p93
      %p95 = pneg %p94
      // Predicated region
      $region9: #{tpu_custom_call.1} parent=5 // pred_check
        _
      $region10: #{tpu_custom_call.1} parent=5 // pred_check_branch
        %97 = sbr.rel (%p94) target = $region12
      $region11: #{tpu_custom_call.1} parent=5 // pred_region
        %s98 = ssub.s32 %s11, 1
        // Predicated region
        $region13: #{tpu_custom_call.1} parent=11 // pred_check
          %p99 = pneg %p58
        $region14: #{tpu_custom_call.1} parent=11 // pred_check_branch
          %101 = sbr.rel (%p99) target = $region16
        $region15: #{tpu_custom_call.1} parent=11 // pred_region
          _
        $region16: #{tpu_custom_call.1} parent=11 // pred_fallthru
          _
      $region12: #{tpu_custom_call.1} parent=5 // pred_fallthru
        _
      %p102 = scmp.lt.s32.totalorder %s11, 2
      // Predicated region
      $region17: #{tpu_custom_call.1} parent=5 // pred_check
        %p103 = pneg %p102
      $region18: #{tpu_custom_call.1} parent=5 // pred_check_branch
        %105 = sbr.rel (%p103) target = $region20
      $region19: #{tpu_custom_call.1} parent=5 // pred_region
        // Predicated region
        $region21: #{tpu_custom_call.1} parent=19 // pred_check
          %p106 = pneg %p31
        $region22: #{tpu_custom_call.1} parent=19 // pred_check_branch
          %108 = sbr.rel (%p106) target = $region24
        $region23: #{tpu_custom_call.1} parent=19 // pred_region
          %s109 = smul.u32 16, %s11
          %p110 = scmp.lt.s32.totalorder %s109, 31
          %s111 = scalar_select %p110, %s109, 31
          %s112 = smul.addr %s111, 2
          %s113 = smul.addr %s112, 8
          %s114 = scalar_lea.vmem %s0, %s113
          %s115 = smul.u32 16, %s11
        $region24: #{tpu_custom_call.1} parent=19 // pred_fallthru
          _
      $region20: #{tpu_custom_call.1} parent=5 // pred_fallthru
        _
      %p116 = scmp.le.s32.totalorder 1, %s11
      %p117 = scmp.lt.s32.totalorder %s11, 3
      %p118 = pnand %p116, %p117
      %p119 = pneg %p118
      // Predicated region
      $region25: #{tpu_custom_call.1} parent=5 // pred_check
        _
      $region26: #{tpu_custom_call.1} parent=5 // pred_check_branch
        %121 = sbr.rel (%p118) target = $region28
      $region27: #{tpu_custom_call.1} parent=5 // pred_region
        %s122 = ssub.s32 %s11, 1
        %s123 = smul.u32 16, %s16
        %p124 = scmp.lt.s32.totalorder %s123, 31
        %s125 = scalar_select %p124, %s123, 31
        %s126 = smul.addr %s125, 2
        %s127 = smul.addr %s126, 8
        %s128 = scalar_lea.vmem %s0, %s127
        %p129 = pneg %p37
        %p130 = pneg %p34
        %p131 = pneg %p58
        %p132 = pneg %p55
        %p133 = pneg %p84
        %p134 = pneg %p81
        %s135 = sand.u32 %s71, 1
        %s136 = scalar_lea.sflag [#allocation3], %s135
        %s137 = sand.u32 %s71, 1
        %s138 = smul.addr %s137, 128
        %s139 = scalar_lea.vmem [#allocation2], %s138
        %s140 = smul.u32 16, %s16
        %p141 = scmp.lt.s32.totalorder %s140, 31
        %s142 = scalar_select %p141, %s140, 31
        %s143 = smul.addr %s142, 2
        %s144 = smul.addr %s143, 8
        %s145 = scalar_lea.vmem %s0, %s144
        %s146 = smul.u32 16, %s16
        %s147 = smul.u32 16, %s16
        %v148 = vld [vmem:[%s145] sm:$0xff]
        %v149 = vld [vmem:[%s145 + $0x8] sm:$0xff]
        %v150 = vld [vmem:[%s145 + $0x10] sm:$0xff]
        %v151 = vld [vmem:[%s145 + $0x18] sm:$0xff]
        %v152 = vld [vmem:[%s145 + $0x20] sm:$0xff]
        %v153 = vld [vmem:[%s145 + $0x28] sm:$0xff]
        %v154 = vld [vmem:[%s145 + $0x30] sm:$0xff]
        %v155 = vld [vmem:[%s145 + $0x38] sm:$0xff]
        %v156 = vld [vmem:[%s145 + $0x40] sm:$0xff]
        %v157 = vld [vmem:[%s145 + $0x48] sm:$0xff]
        %v158 = vld [vmem:[%s145 + $0x50] sm:$0xff]
        %v159 = vld [vmem:[%s145 + $0x58] sm:$0xff]
        %v160 = vld [vmem:[%s145 + $0x60] sm:$0xff]
        %v161 = vld [vmem:[%s145 + $0x68] sm:$0xff]
        %v162 = vld [vmem:[%s145 + $0x70] sm:$0xff]
        %v163 = vld [vmem:[%s145 + $0x78] sm:$0xff]
        %v164 = vld [vmem:[%s145 + $0x80] sm:$0xff]
        %v165 = vld [vmem:[%s145 + $0x88] sm:$0xff]
        %v166 = vld [vmem:[%s145 + $0x90] sm:$0xff]
        %v167 = vld [vmem:[%s145 + $0x98] sm:$0xff]
        %v168 = vld [vmem:[%s145 + $0xa0] sm:$0xff]
        %v169 = vld [vmem:[%s145 + $0xa8] sm:$0xff]
        %v170 = vld [vmem:[%s145 + $0xb0] sm:$0xff]
        %v171 = vld [vmem:[%s145 + $0xb8] sm:$0xff]
        %v172 = vld [vmem:[%s145 + $0xc0] sm:$0xff]
        %v173 = vld [vmem:[%s145 + $0xc8] sm:$0xff]
        %v174 = vld [vmem:[%s145 + $0xd0] sm:$0xff]
        %v175 = vld [vmem:[%s145 + $0xd8] sm:$0xff]
        %v176 = vld [vmem:[%s145 + $0xe0] sm:$0xff]
        %v177 = vld [vmem:[%s145 + $0xe8] sm:$0xff]
        %v178 = vld [vmem:[%s145 + $0xf0] sm:$0xff]
        %v179 = vld [vmem:[%s145 + $0xf8] sm:$0xff]
        %v180 = vld [vmem:[%s1] sm:$0xff]
        %v181 = vld [vmem:[%s1 + $0x8] sm:$0xff]
        %v182 = vld [vmem:[%s1 + $0x10] sm:$0xff]
        %v183 = vld [vmem:[%s1 + $0x18] sm:$0xff]
        %v184 = vld [vmem:[%s1 + $0x20] sm:$0xff]
        %v185 = vld [vmem:[%s1 + $0x28] sm:$0xff]
        %v186 = vld [vmem:[%s1 + $0x30] sm:$0xff]
        %v187 = vld [vmem:[%s1 + $0x38] sm:$0xff]
        %v188 = vld [vmem:[%s1 + $0x40] sm:$0xff]
        %v189 = vld [vmem:[%s1 + $0x48] sm:$0xff]
        %v190 = vld [vmem:[%s1 + $0x50] sm:$0xff]
        %v191 = vld [vmem:[%s1 + $0x58] sm:$0xff]
        %v192 = vld [vmem:[%s1 + $0x60] sm:$0xff]
        %v193 = vld [vmem:[%s1 + $0x68] sm:$0xff]
        %v194 = vld [vmem:[%s1 + $0x70] sm:$0xff]
        %v195 = vld [vmem:[%s1 + $0x78] sm:$0xff]
        %v196 = vld [vmem:[%s1 + $0x80] sm:$0xff]
        %v197 = vld [vmem:[%s1 + $0x88] sm:$0xff]
        %v198 = vld [vmem:[%s1 + $0x90] sm:$0xff]
        %v199 = vld [vmem:[%s1 + $0x98] sm:$0xff]
        %v200 = vld [vmem:[%s1 + $0xa0] sm:$0xff]
        %v201 = vld [vmem:[%s1 + $0xa8] sm:$0xff]
        %v202 = vld [vmem:[%s1 + $0xb0] sm:$0xff]
        %v203 = vld [vmem:[%s1 + $0xb8] sm:$0xff]
        %vm204 = vcmask 523264
        %v206 = vsel %vm204, %v149, 0
        %v209 = vsel %vm204, %v151, 0
        %v212 = vsel %vm204, %v153, 0
        %v215 = vsel %vm204, %v155, 0
        %v218 = vsel %vm204, %v157, 0
        %v221 = vsel %vm204, %v159, 0
        %v224 = vsel %vm204, %v161, 0
        %v227 = vsel %vm204, %v163, 0
        %v230 = vsel %vm204, %v165, 0
        %v233 = vsel %vm204, %v167, 0
        %v236 = vsel %vm204, %v169, 0
        %v239 = vsel %vm204, %v171, 0
        %v242 = vsel %vm204, %v173, 0
        %v245 = vsel %vm204, %v175, 0
        %v248 = vsel %vm204, %v177, 0
        %v251 = vsel %vm204, %v179, 0
        %253 = vmatprep.subr.mxu0 0.0
        %254 = vmatpush1.msra.mxu0 %v195
        %255 = vmatprep.subr.mxu0 0.0
        %256 = vmatpush1.msra.mxu0 %v194
        %257 = vmatprep.subr.mxu0 0.0
        %258 = vmatpush1.msra.mxu0 %v193
        %259 = vmatprep.subr.mxu0 0.0
        %260 = vmatpush1.msra.mxu0 %v192
        %261 = vmatprep.subr.mxu0 0.0
        %262 = vmatpush1.msra.mxu0 %v191
        %263 = vmatprep.subr.mxu0 0.0
        %264 = vmatpush1.msra.mxu0 %v190
        %265 = vmatprep.subr.mxu0 0.0
        %266 = vmatpush1.msra.mxu0 %v189
        %267 = vmatprep.subr.mxu0 0.0
        %268 = vmatpush1.msra.mxu0 %v188
        %269 = vmatprep.subr.mxu0 0.0
        %270 = vmatpush1.msra.mxu0 %v187
        %271 = vmatprep.subr.mxu0 0.0
        %272 = vmatpush1.msra.mxu0 %v186
        %273 = vmatprep.subr.mxu0 0.0
        %274 = vmatpush1.msra.mxu0 %v185
        %275 = vmatprep.subr.mxu0 0.0
        %276 = vmatpush1.msra.mxu0 %v184
        %277 = vmatprep.subr.mxu0 0.0
        %278 = vmatpush1.msra.mxu0 %v183
        %279 = vmatprep.subr.mxu0 0.0
        %280 = vmatpush1.msra.mxu0 %v182
        %281 = vmatprep.subr.mxu0 0.0
        %282 = vmatpush1.msra.mxu0 %v181
        %283 = vmatprep.subr.mxu0 0.0
        %284 = vmatpush1.msra.mxu0 %v180
        %285 = vmatprep.subr.mxu0 0.0
        %286 = vmatpush2.msra.mxu0 0.0
        %287 = vmatprep.subr.mxu0 0.0
        %288 = vmatpush2.msra.mxu0 0.0
        %289 = vmatprep.subr.mxu0 0.0
        %290 = vmatpush2.msra.mxu0 0.0
        %291 = vmatprep.subr.mxu0 0.0
        %292 = vmatpush2.msra.mxu0 0.0
        %293 = vmatprep.subr.mxu0 0.0
        %294 = vmatpush2.msra.mxu0 0.0
        %295 = vmatprep.subr.mxu0 0.0
        %296 = vmatpush2.msra.mxu0 0.0
        %297 = vmatprep.subr.mxu0 0.0
        %298 = vmatpush2.msra.mxu0 0.0
        %299 = vmatprep.subr.mxu0 0.0
        %300 = vmatpush2.msra.mxu0 0.0
        %301 = vmatprep.subr.mxu0 0.0
        %302 = vmatpush2.msra.mxu0 %v203
        %303 = vmatprep.subr.mxu0 0.0
        %304 = vmatpush2.msra.mxu0 %v202
        %305 = vmatprep.subr.mxu0 0.0
        %306 = vmatpush2.msra.mxu0 %v201
        %307 = vmatprep.subr.mxu0 0.0
        %308 = vmatpush2.msra.mxu0 %v200
        %309 = vmatprep.subr.mxu0 0.0
        %310 = vmatpush2.msra.mxu0 %v199
        %311 = vmatprep.subr.mxu0 0.0
        %312 = vmatpush2.msra.mxu0 %v198
        %313 = vmatprep.subr.mxu0 0.0
        %314 = vmatpush2.msra.mxu0 %v197
        %315 = vmatprep.subr.mxu0 0.0
        %316 = vmatpush2.msra.mxu0 %v196
        %317 = vmatprep.mubr.f32.mxu0 %v206
        %318 = vmatmul.mubr.f32.gmra.mxu0 %v148
        %v319 = vpop.f32.mrf.mxu0
        %v320 = vadd.f32 0.0, %v319
        %v321 = vpop.f32.mrf.mxu0
        %322 = vmatprep.mubr.f32.mxu0 %v209
        %323 = vmatmul.mubr.f32.gmra.mxu0 %v150
        %v324 = vpop.f32.mrf.mxu0
        %v325 = vadd.f32 0.0, %v324
        %v326 = vpop.f32.mrf.mxu0
        %327 = vmatprep.mubr.f32.mxu0 %v212
        %328 = vmatmul.mubr.f32.gmra.mxu0 %v152
        %v329 = vpop.f32.mrf.mxu0
        %v330 = vadd.f32 0.0, %v329
        %v331 = vpop.f32.mrf.mxu0
        %332 = vmatprep.mubr.f32.mxu0 %v215
        %333 = vmatmul.mubr.f32.gmra.mxu0 %v154
        %v334 = vpop.f32.mrf.mxu0
        %v335 = vadd.f32 0.0, %v334
        %v336 = vpop.f32.mrf.mxu0
        %337 = vmatprep.mubr.f32.mxu0 %v218
        %338 = vmatmul.mubr.f32.gmra.mxu0 %v156
        %v339 = vpop.f32.mrf.mxu0
        %v340 = vadd.f32 0.0, %v339
        %v341 = vpop.f32.mrf.mxu0
        %342 = vmatprep.mubr.f32.mxu0 %v221
        %343 = vmatmul.mubr.f32.gmra.mxu0 %v158
        %v344 = vpop.f32.mrf.mxu0
        %v345 = vadd.f32 0.0, %v344
        %v346 = vpop.f32.mrf.mxu0
        %347 = vmatprep.mubr.f32.mxu0 %v224
        %348 = vmatmul.mubr.f32.gmra.mxu0 %v160
        %v349 = vpop.f32.mrf.mxu0
        %v350 = vadd.f32 0.0, %v349
        %v351 = vpop.f32.mrf.mxu0
        %352 = vmatprep.mubr.f32.mxu0 %v227
        %353 = vmatmul.mubr.f32.gmra.mxu0 %v162
        %v354 = vpop.f32.mrf.mxu0
        %v355 = vadd.f32 0.0, %v354
        %v356 = vpop.f32.mrf.mxu0
        %357 = vmatprep.mubr.f32.mxu0 %v230
        %358 = vmatmul.mubr.f32.gmra.mxu0 %v164
        %v359 = vpop.f32.mrf.mxu0
        %v360 = vadd.f32 0.0, %v359
        %v361 = vpop.f32.mrf.mxu0
        %362 = vmatprep.mubr.f32.mxu0 %v233
        %363 = vmatmul.mubr.f32.gmra.mxu0 %v166
        %v364 = vpop.f32.mrf.mxu0
        %v365 = vadd.f32 0.0, %v364
        %v366 = vpop.f32.mrf.mxu0
        %367 = vmatprep.mubr.f32.mxu0 %v236
        %368 = vmatmul.mubr.f32.gmra.mxu0 %v168
        %v369 = vpop.f32.mrf.mxu0
        %v370 = vadd.f32 0.0, %v369
        %v371 = vpop.f32.mrf.mxu0
        %372 = vmatprep.mubr.f32.mxu0 %v239
        %373 = vmatmul.mubr.f32.gmra.mxu0 %v170
        %v374 = vpop.f32.mrf.mxu0
        %v375 = vadd.f32 0.0, %v374
        %v376 = vpop.f32.mrf.mxu0
        %377 = vmatprep.mubr.f32.mxu0 %v242
        %378 = vmatmul.mubr.f32.gmra.mxu0 %v172
        %v379 = vpop.f32.mrf.mxu0
        %v380 = vadd.f32 0.0, %v379
        %v381 = vpop.f32.mrf.mxu0
        %382 = vmatprep.mubr.f32.mxu0 %v245
        %383 = vmatmul.mubr.f32.gmra.mxu0 %v174
        %v384 = vpop.f32.mrf.mxu0
        %v385 = vadd.f32 0.0, %v384
        %v386 = vpop.f32.mrf.mxu0
        %387 = vmatprep.mubr.f32.mxu0 %v248
        %388 = vmatmul.mubr.f32.gmra.mxu0 %v176
        %v389 = vpop.f32.mrf.mxu0
        %v390 = vadd.f32 0.0, %v389
        %v391 = vpop.f32.mrf.mxu0
        %392 = vmatprep.mubr.f32.mxu0 %v251
        %393 = vmatmul.mubr.f32.gmra.mxu0 %v178
        %v394 = vpop.f32.mrf.mxu0
        %v395 = vadd.f32 0.0, %v394
        %v396 = vpop.f32.mrf.mxu0
        %397 = vdwg.mxu0
        %398 = vst [vmem:[%s139] sm:$0xff] %v320
        %399 = vst [vmem:[%s139 + $0x8] sm:$0xff] %v325
        %400 = vst [vmem:[%s139 + $0x10] sm:$0xff] %v330
        %401 = vst [vmem:[%s139 + $0x18] sm:$0xff] %v335
        %402 = vst [vmem:[%s139 + $0x20] sm:$0xff] %v340
        %403 = vst [vmem:[%s139 + $0x28] sm:$0xff] %v345
        %404 = vst [vmem:[%s139 + $0x30] sm:$0xff] %v350
        %405 = vst [vmem:[%s139 + $0x38] sm:$0xff] %v355
        %406 = vst [vmem:[%s139 + $0x40] sm:$0xff] %v360
        %407 = vst [vmem:[%s139 + $0x48] sm:$0xff] %v365
        %408 = vst [vmem:[%s139 + $0x50] sm:$0xff] %v370
        %409 = vst [vmem:[%s139 + $0x58] sm:$0xff] %v375
        %410 = vst [vmem:[%s139 + $0x60] sm:$0xff] %v380
        %411 = vst [vmem:[%s139 + $0x68] sm:$0xff] %v385
        %412 = vst [vmem:[%s139 + $0x70] sm:$0xff] %v390
        %413 = vst [vmem:[%s139 + $0x78] sm:$0xff] %v395
        %s414 = sand.u32 %s71, 1
        %s415 = scalar_lea.sflag [#allocation3], %s414
        %s416 = sand.u32 %s71, 1
        %s417 = smul.addr %s416, 128
        %s418 = scalar_lea.vmem [#allocation2], %s417
        // Predicated region
        $region29: #{tpu_custom_call.1} parent=27 // pred_check
          %p419 = pneg %p81
        $region30: #{tpu_custom_call.1} parent=27 // pred_check_branch
          %421 = sbr.rel (%p419) target = $region32
        $region31: #{tpu_custom_call.1} parent=27 // pred_region
          %s422 = smul.u32 16, %s16
          %s424 = ssub.s32 2048, 2048
          %425 = vsyncadd %s415, %s424
          %s426 = smul.addr %s422, 128
          %s427 = scalar_lea.hbm %s2, %s426
          %s428 = sshll.u32 %s418, 4
          %s429 = int_to_ptr.vmem [resolvable:$true] %s428
          %434 = dma.vmem_to_hbm [thread:$0]  %s429, 2048, %s427, %s415, 128, 128, 8
        $region32: #{tpu_custom_call.1} parent=27 // pred_fallthru
          _
      $region28: #{tpu_custom_call.1} parent=5 // pred_fallthru
        _
      %p435 = scmp.le.s32.totalorder 2, %s11
      // Predicated region
      $region33: #{tpu_custom_call.1} parent=5 // pred_check
        %p436 = pneg %p435
      $region34: #{tpu_custom_call.1} parent=5 // pred_check_branch
        %438 = sbr.rel (%p436) target = $region36
      $region35: #{tpu_custom_call.1} parent=5 // pred_region
        %s439 = ssub.s32 %s11, 2
        // Predicated region
        $region37: #{tpu_custom_call.1} parent=35 // pred_check
          %p440 = pneg %p87
        $region38: #{tpu_custom_call.1} parent=35 // pred_check_branch
          %442 = sbr.rel (%p440) target = $region40
        $region39: #{tpu_custom_call.1} parent=35 // pred_region
          %s443 = sand.u32 %s72, 1
          %s444 = scalar_lea.sflag [#allocation3], %s443
          %s445 = sand.u32 %s72, 1
          %s446 = smul.addr %s445, 128
          %s447 = scalar_lea.vmem [#allocation2], %s446
          %448 = dma.done %s444, 2048
        $region40: #{tpu_custom_call.1} parent=35 // pred_fallthru
          _
      $region36: #{tpu_custom_call.1} parent=5 // pred_fallthru
        _
    $region6: #{tpu_custom_call.1} parent=1 // loop_footer
      %s15 = sadd.s32 1, %s11
    $region7: #{tpu_custom_call.1} parent=1 // loop_footer_branch
      %10 = sbr.rel target = $region3
    $region8: #{tpu_custom_call.1} parent=1 // loop_exit
      _
    %449 = vsyncpa [#allocation3], 1
    %s450 = scalar_lea.sflag [#allocation3], 1
    %451 = vsyncpa %s450, 1

</llo_original>
